<compile_context>
chip_gen: v6e
topology: v6e:2x2x1
jax: 0.10.0
libtpu: 0.0.40
codegen_flags: <defaults>
</compile_context>

<pallas_src>
import functools

import jax
import jax.numpy as jnp
from jax.experimental import pallas as pl
from jax.experimental.pallas import tpu as pltpu


_MAX_TK = 2048  # contraction-tile cap: bounds resident weight block to tk x OUT_PAD


def _cdiv(a, b):
    return -(-a // b)


def _round_up(v, m):
    return _cdiv(v, m) * m


def _choose_k_tiling(c):
    """Shared contraction tiling: returns (tk, k_tiles, c_pad)."""
    if c <= _MAX_TK:
        return c, 1, c                      # full-C block, no padding needed
    k_tiles = _cdiv(c, _MAX_TK)
    tk = _round_up(_cdiv(c, k_tiles), 128)  # lane/MXU aligned contraction tile
    return tk, k_tiles, tk * k_tiles


def prepare_fused_params(w_cls, b_cls, w_bbox, b_bbox):
    """One-time weight prep (model-load time, not per forward).

    PyTorch Linear layout in:  w_cls (K, C), b_cls (K,), w_bbox (4K, C), b_bbox (4K,)
    Returns: w_fused (C_pad, OUT_PAD) bf16, b_fused (1, OUT_PAD) f32.
    Columns [0:K] = cls_score, [K:5K] = bbox_pred, rest zero padding so
    OUT_PAD is a multiple of 128 (lane-dense stores).
    """
    k = w_cls.shape[0]
    k4 = w_bbox.shape[0]
    c = w_cls.shape[1]
    out_dim = k + k4
    out_pad = max(128, _round_up(out_dim, 128))
    _, _, c_pad = _choose_k_tiling(c)

    w_fused = jnp.concatenate([w_cls.T, w_bbox.T], axis=1).astype(jnp.float32)
    b_fused = jnp.concatenate([b_cls, b_bbox], axis=0).reshape(1, out_dim)
    w_fused = jnp.pad(w_fused, ((0, c_pad - c), (0, out_pad - out_dim)))
    b_fused = jnp.pad(b_fused.astype(jnp.float32), ((0, 0), (0, out_pad - out_dim)))
    # bf16 weights: native MXU dtype, halves weight HBM/VMEM bytes.
    return w_fused.astype(jnp.bfloat16), b_fused


def _fused_predictor_kernel(x_ref, w_ref, b_ref, out_ref, acc_ref):
    # x_ref: (TILE_N, TK) bf16, w_ref: (TK, OUT_PAD) bf16, b_ref: (1, OUT_PAD) f32
    # acc_ref: (TILE_N, OUT_PAD) f32 scratch accumulator over the K grid axis.
    kk = pl.program_id(1)

    @pl.when(kk == 0)
    def _init():
        acc_ref[...] = jnp.zeros_like(acc_ref)

    acc_ref[...] += jnp.dot(x_ref[...], w_ref[...],
                            preferred_element_type=jnp.float32)

    @pl.when(kk == pl.num_programs(1) - 1)
    def _finalize():
        out_ref[...] = (acc_ref[...] + b_ref[...]).astype(out_ref.dtype)


@functools.partial(jax.jit,
                   static_argnames=("num_classes", "tile_n", "split_outputs"))
def fast_rcnn_predictor(x, w_fused, b_fused, *, num_classes, tile_n=512,
                        split_outputs=True):
    """x: (N, ...) per-ROI features; w_fused/b_fused from prepare_fused_params.

    Outputs are explicitly float32 (matches the f32 PyTorch head) even though
    the MXU stream is bf16.  Set split_outputs=False to get the raw fused
    (N, OUT_PAD) slab (cols [:K]=scores, [K:5K]=boxes) and skip the two
    column-slice copies when the consumer can handle offsets itself.
    """
    n = x.shape[0]
    x2 = x.reshape(n, -1)                    # flatten(start_dim=1)
    c = x2.shape[1]
    c_pad_w, out_pad = w_fused.shape
    k = num_classes
    k4 = 4 * num_classes

    if n == 0:  # possible after proposal filtering: no pallas_call needed
        if split_outputs:
            return {'props': jnp.zeros((0, k4), jnp.float32),
                    'props_score': jnp.zeros((0, k), jnp.float32)}
        return {'fused': jnp.zeros((0, out_pad), jnp.float32)}

    tk, k_tiles, c_pad = _choose_k_tiling(c)
    if c_pad != c_pad_w:
        raise ValueError(
            f"w_fused contraction dim {c_pad_w} does not match features "
            f"(flattened C={c} -> expected {c_pad}); re-run prepare_fused_params.")

    # bf16 streaming: no-op if x is already bf16; in a full model this cast
    # fuses into the producing op.  Accumulation stays f32 inside the kernel.
    x2 = x2.astype(jnp.bfloat16)
    w_fused = w_fused.astype(jnp.bfloat16)
    if c_pad > c:
        # Only for very large C (K-tiled path): contraction dim must be zero
        # padded explicitly (ragged reads on K would corrupt valid rows).
        x2 = jnp.pad(x2, ((0, 0), (0, c_pad - c)))

    # ROI tile: big enough to amortize per-grid-step overhead, never (much)
    # larger than N itself.  Ragged last tile handled by Pallas (no row pad).
    tn = min(_round_up(tile_n, 8), _round_up(n, 8))
    n_tiles = _cdiv(n, tn)
    grid = (n_tiles, k_tiles)

    # VMEM budget from the actual working set (double-buffered streams +
    # resident weights/bias + f32 accumulator), 2x headroom, <= 64 MiB so it
    # is safe on v7x as well as v5e/v6e.
    working = (2 * tn * tk * 2            # x tiles (bf16)
               + 2 * tk * out_pad * 2     # weight tiles (bf16)
               + 2 * 8 * out_pad * 4      # bias (padded sublane)
               + 2 * tn * out_pad * 4     # output tiles (f32)
               + tn * out_pad * 4)        # accumulator scratch (f32)
    vmem_limit = int(min(64 * 1024 * 1024, max(32 * 1024 * 1024, 2 * working)))

    fused_out = pl.pallas_call(
        _fused_predictor_kernel,
        out_shape=jax.ShapeDtypeStruct((n, out_pad), jnp.float32),
        grid_spec=pltpu.PrefetchScalarGridSpec(
            num_scalar_prefetch=0,
            grid=grid,
            in_specs=[
                # x tile streams over (roi, k) grid (pipelined DMA).
                pl.BlockSpec((tn, tk), lambda i, kk: (i, kk)),
                # Weights: resident when k_tiles == 1, streamed over k otherwise.
                pl.BlockSpec((tk, out_pad), lambda i, kk: (kk, 0)),
                # Bias stays resident in VMEM.
                pl.BlockSpec((1, out_pad), lambda i, kk: (0, 0)),
            ],
            out_specs=pl.BlockSpec((tn, out_pad), lambda i, kk: (i, 0)),
            scratch_shapes=[pltpu.VMEM((tn, out_pad), jnp.float32)],
        ),
        compiler_params=pltpu.CompilerParams(
            # ROI tiles independent -> megacore split on v7x; K is a reduction.
            dimension_semantics=("parallel", "arbitrary"),
            vmem_limit_bytes=vmem_limit,
        ),
        cost_estimate=pl.CostEstimate(
            flops=2 * n * c_pad * out_pad,
            transcendentals=0,
            bytes_accessed=(n * c_pad * 2 + c_pad * out_pad * 2
                            + out_pad * 4 + n * out_pad * 4),
        ),
    )(x2, w_fused, b_fused)

    if not split_outputs:
        return {'fused': fused_out}
    # Column split of the lane-dense slab (extra XLA copies; use
    # split_outputs=False to skip when the consumer accepts offsets).
    score = fused_out[:, :k]
    bbox = fused_out[:, k:k + k4]
    return {'props': bbox, 'props_score': score}


if __name__ == "__main__":
    key = jax.random.PRNGKey(0)
    k_x, k_wc, k_bc, k_wb, k_bb, k_x2 = jax.random.split(key, 6)

    # Small shapes: features (8, 2, 2) -> flattened in_channels = 32,
    # num_classes = 8 (incl. background).
    num_classes = 8
    in_channels = 32

    # PyTorch Linear weight layout (out_features, in_features).
    w_cls = 0.05 * jax.random.normal(k_wc, (num_classes, in_channels), jnp.float32)
    b_cls = 0.01 * jax.random.normal(k_bc, (num_classes,), jnp.float32)
    w_bbox = 0.05 * jax.random.normal(k_wb, (num_classes * 4, in_channels), jnp.float32)
    b_bbox = 0.01 * jax.random.normal(k_bb, (num_classes * 4,), jnp.float32)

    # One-time weight fusion (hoisted out of the per-forward hot path).
    w_fused, b_fused = prepare_fused_params(w_cls, b_cls, w_bbox, b_bbox)

    def reference(xa):
        # Matches the kernel's numerics: bf16 inputs/weights, f32 accumulate,
        # f32 bias add (the PyTorch module math on bf16-rounded operands).
        xf = xa.reshape(xa.shape[0], -1)
        xb = xf.astype(jnp.bfloat16).astype(jnp.float32)
        wc = w_cls.astype(jnp.bfloat16).astype(jnp.float32)
        wb = w_bbox.astype(jnp.bfloat16).astype(jnp.float32)
        hi = jax.lax.Precision.HIGHEST
        ref_score = jnp.dot(xb, wc.T, precision=hi) + b_cls
        ref_bbox = jnp.dot(xb, wb.T, precision=hi) + b_bbox
        return ref_bbox, ref_score

    # Case 1: tiny ROI batch (single tile).
    x = jax.random.normal(k_x, (8, 8, 2, 2), dtype=jnp.float32)
    out = fast_rcnn_predictor(x, w_fused, b_fused, num_classes=num_classes)
    jax.block_until_ready(out)
    ref_bbox, ref_score = reference(x)
    assert out['props'].shape == (8, num_classes * 4)
    assert out['props_score'].shape == (8, num_classes)
    assert out['props'].dtype == jnp.float32
    assert jnp.allclose(out['props'], ref_bbox, atol=1e-3)
    assert jnp.allclose(out['props_score'], ref_score, atol=1e-3)

    # Case 2: ragged ROI count (13 ROIs, tile_n=8 -> 2 tiles, last one ragged)
    # exercises the cdiv grid with OOB output rows dropped (no wrapper padding).
    x_rag = jax.random.normal(k_x2, (13, 8, 2, 2), dtype=jnp.float32)
    out_rag = fast_rcnn_predictor(x_rag, w_fused, b_fused,
                                  num_classes=num_classes, tile_n=8)
    jax.block_until_ready(out_rag)
    ref_bbox_r, ref_score_r = reference(x_rag)
    assert out_rag['props'].shape == (13, num_classes * 4)
    assert out_rag['props_score'].shape == (13, num_classes)
    assert jnp.allclose(out_rag['props'], ref_bbox_r, atol=1e-3)
    assert jnp.allclose(out_rag['props_score'], ref_score_r, atol=1e-3)

    print("KERNEL_OK")
</pallas_src>

<mosaic_0001>
module attributes {stable_mosaic.version = 11 : i64} {
  func.func @_fused_predictor_kernel(%arg0: i32, %arg1: i32, %arg2: memref<8x32xbf16, #tpu.memory_space<vmem>>, %arg3: memref<32x128xbf16, #tpu.memory_space<vmem>>, %arg4: memref<1x128xf32, #tpu.memory_space<vmem>>, %arg5: memref<8x128xf32, #tpu.memory_space<vmem>>, %arg6: memref<8x128xf32, #tpu.memory_space<vmem>>) attributes {dimension_semantics = [#tpu.dimension_semantics<parallel>, #tpu.dimension_semantics<arbitrary>], iteration_bounds = array<i64: 1, 1>, scalar_prefetch = 0 : i64, scratch_operands = 1 : i64, tpu.core_type = #tpu.core_type<tc>, window_params = [{transform_indices = @transform_0, window_bounds = array<i64: 8, 32>}, {transform_indices = @transform_1, window_bounds = array<i64: 32, 128>}, {pipeline_mode = #tpu.pipeline_mode<synchronous>, transform_indices = @transform_2, window_bounds = array<i64: 1, 128>}, {transform_indices = @transform_3, window_bounds = array<i64: 8, 128>}]} {
    %c0_i32 = arith.constant 0 : i32
    %0 = arith.cmpi eq, %arg1, %c0_i32 : i32
    %1 = arith.extui %0 : i1 to i32
    %c0_i32_0 = arith.constant 0 : i32
    %2 = arith.cmpi ne, %1, %c0_i32_0 : i32
    scf.if %2 {
      %cst_10 = arith.constant 0.000000e+00 : f32
      %12 = vector.broadcast %cst_10 : f32 to vector<8x128xf32>
      %c0_11 = arith.constant 0 : index
      %c0_12 = arith.constant 0 : index
      %13 = vector.load %arg6[%c0_11, %c0_12] : memref<8x128xf32, #tpu.memory_space<vmem>>, vector<8x128xf32>
      tpu.vector_store %arg6[%c0_11, %c0_12], %12 {strides = array<i32>} : memref<8x128xf32, #tpu.memory_space<vmem>>, vector<8x128xf32>,
    } else {
    }
    %c0 = arith.constant 0 : index
    %c0_1 = arith.constant 0 : index
    %3 = vector.load %arg6[%c0, %c0_1] : memref<8x128xf32, #tpu.memory_space<vmem>>, vector<8x128xf32>
    %c0_2 = arith.constant 0 : index
    %c0_3 = arith.constant 0 : index
    %4 = vector.load %arg2[%c0_2, %c0_3] : memref<8x32xbf16, #tpu.memory_space<vmem>>, vector<8x32xbf16>
    %c0_4 = arith.constant 0 : index
    %c0_5 = arith.constant 0 : index
    %5 = vector.load %arg3[%c0_4, %c0_5] : memref<32x128xbf16, #tpu.memory_space<vmem>>, vector<32x128xbf16>
    %cst = arith.constant dense<0.000000e+00> : vector<8x128xf32>
    %6 = tpu.matmul %4, %5, %cst {dimension_numbers = #tpu.dot_dimension_numbers<[1], [0], [0], [1], [0, 0, 1, 1], [], []>} : vector<8x32xbf16>, vector<32x128xbf16>, vector<8x128xf32> -> vector<8x128xf32>
    %7 = arith.addf %3, %6 : vector<8x128xf32>
    %c0_6 = arith.constant 0 : index
    %c0_7 = arith.constant 0 : index
    %8 = vector.load %arg6[%c0_6, %c0_7] : memref<8x128xf32, #tpu.memory_space<vmem>>, vector<8x128xf32>
    tpu.vector_store %arg6[%c0_6, %c0_7], %7 {strides = array<i32>} : memref<8x128xf32, #tpu.memory_space<vmem>>, vector<8x128xf32>,
    %c0_i32_8 = arith.constant 0 : i32
    %9 = arith.cmpi eq, %arg1, %c0_i32_8 : i32
    %10 = arith.extui %9 : i1 to i32
    %c0_i32_9 = arith.constant 0 : i32
    %11 = arith.cmpi ne, %10, %c0_i32_9 : i32
    scf.if %11 {
      %c0_10 = arith.constant 0 : index
      %c0_11 = arith.constant 0 : index
      %12 = vector.load %arg6[%c0_10, %c0_11] : memref<8x128xf32, #tpu.memory_space<vmem>>, vector<8x128xf32>
      %c0_12 = arith.constant 0 : index
      %c0_13 = arith.constant 0 : index
      %13 = vector.load %arg4[%c0_12, %c0_13] : memref<1x128xf32, #tpu.memory_space<vmem>>, vector<1x128xf32>
      %14 = vector.broadcast %13 : vector<1x128xf32> to vector<8x128xf32>
      %15 = arith.addf %12, %14 : vector<8x128xf32>
      %c0_14 = arith.constant 0 : index
      %c0_15 = arith.constant 0 : index
      %16 = vector.load %arg5[%c0_14, %c0_15] : memref<8x128xf32, #tpu.memory_space<vmem>>, vector<8x128xf32>
      tpu.vector_store %arg5[%c0_14, %c0_15], %15 {strides = array<i32>} : memref<8x128xf32, #tpu.memory_space<vmem>>, vector<8x128xf32>,
    } else {
    }
    return
  }
  func.func @transform_0(%arg0: i32, %arg1: i32) -> (i32, i32) {
    %c0_i32 = arith.constant 0 : i32
    return %arg0, %arg1 : i32, i32
  }
  func.func @transform_1(%arg0: i32, %arg1: i32) -> (i32, i32) {
    %c0_i32 = arith.constant 0 : i32
    %c0_i32_0 = arith.constant 0 : i32
    return %arg1, %c0_i32 : i32, i32
  }
  func.func @transform_2(%arg0: i32, %arg1: i32) -> (i32, i32) {
    %c0_i32 = arith.constant 0 : i32
    %c0_i32_0 = arith.constant 0 : i32
    %c0_i32_1 = arith.constant 0 : i32
    return %c0_i32, %c0_i32_0 : i32, i32
  }
  func.func @transform_3(%arg0: i32, %arg1: i32) -> (i32, i32) {
    %c0_i32 = arith.constant 0 : i32
    %c0_i32_0 = arith.constant 0 : i32
    return %arg0, %c0_i32 : i32, i32
  }
}

</mosaic_0001>

<llo_original>
// kernel: fast_rcnn_predictor.1
$region0: #{fast_rcnn_predictor.1}
  #allocation0 [shape = 'u32[]', space=smem, size = 0x4, offset = 0x4, fixed_abs, tag = 'smem constant byte address 0x4 - core index']
  #allocation1 [shape = 'u32[144,128]{1,0:T(1,128)}', space=vmem, size = 0x12000, scoped, tag = 'internal scratch']
  #allocation2 [shape = 'f32[8,128]{1,0:T(8,128)}', space=vmem, size = 0x1000, scoped, tag = 'scratch operand']
  %s0 = inlined_call_operand.vmem [shape: bf16[8,32], index: 0, kind: input, shape index: {}]
  %s1 = inlined_call_operand.vmem [shape: bf16[32,128], index: 1, kind: input, shape index: {}]
  %s2 = inlined_call_operand.vmem [shape: f32[1,128], index: 2, kind: input, shape index: {}]
  %s3 = inlined_call_operand.vmem [shape: f32[8,128], index: 3, kind: output, shape index: {}]
  %s4 = sld [smem:[#allocation0]]
  $region30: #{fast_rcnn_predictor.1} parent=0
    _
  %s6 = ssub.s32 1, %s4
  %s7 = scalar_select 0, %s6, %s4
  // Predicated region
  $region2: #{fast_rcnn_predictor.1} parent=0 // pred_check
    _
  $region3: #{fast_rcnn_predictor.1} parent=0 // pred_check_branch
    %9 = sbr.rel (0) target = $region5
  $region4: #{fast_rcnn_predictor.1} parent=0 // pred_region
    _
  $region5: #{fast_rcnn_predictor.1} parent=0 // pred_fallthru
    _
  // Predicated region
  $region6: #{fast_rcnn_predictor.1} parent=0 // pred_check
    _
  $region7: #{fast_rcnn_predictor.1} parent=0 // pred_check_branch
    %11 = sbr.rel (0) target = $region9
  $region8: #{fast_rcnn_predictor.1} parent=0 // pred_region
    _
  $region9: #{fast_rcnn_predictor.1} parent=0 // pred_fallthru
    _
  // Predicated region
  $region10: #{fast_rcnn_predictor.1} parent=0 // pred_check
    _
  $region11: #{fast_rcnn_predictor.1} parent=0 // pred_check_branch
    %13 = sbr.rel (0) target = $region13
  $region12: #{fast_rcnn_predictor.1} parent=0 // pred_region
    _
  $region13: #{fast_rcnn_predictor.1} parent=0 // pred_fallthru
    _
  %p15 = scmp.eq.s32.totalorder 0, 0
  // Predicated region
  $region14: #{fast_rcnn_predictor.1} parent=0 // pred_check
    %p16 = pneg %p15
  $region15: #{fast_rcnn_predictor.1} parent=0 // pred_check_branch
    %18 = sbr.rel (%p16) target = $region17
  $region16: #{fast_rcnn_predictor.1} parent=0 // pred_region
    %19 = vst [vmem:[#allocation2] sm:$0xff] 0.0
  $region17: #{fast_rcnn_predictor.1} parent=0 // pred_fallthru
    _
  %v20 = vld [vmem:[#allocation2] sm:$0xff]
  %v21 = vld [vmem:[%s0] sm:$0xf]
  %v22 = vld [vmem:[%s1] sm:$0xf]
  %v23 = vld [vmem:[%s1 + $0x4] sm:$0xf]
  %v24 = vld [vmem:[%s1 + $0x8] sm:$0xf]
  %v25 = vld [vmem:[%s1 + $0xc] sm:$0xf]
  %v30 = vunpack.c.l.b16 %v22
  %v31 = vunpack.c.l.b16 %v23
  %v32 = vunpack.c.l.b16 %v24
  %v33 = vunpack.c.l.b16 %v25
  %v34 = vpack.c.b16 %v31, %v30
  %v35 = vpack.c.b16 %v33, %v32
  %vm38 = vcmask 261120
  %v40 = vsel %vm38, %v21, 0
  %42 = vmatprep.subr.bf16.mxu0 0
  %43 = vmatpush1.bf16.msra.mxu0 0
  %44 = vmatprep.subr.bf16.mxu0 0
  %45 = vmatpush1.bf16.msra.mxu0 0
  %46 = vmatprep.subr.bf16.mxu0 0
  %47 = vmatpush1.bf16.msra.mxu0 0
  %48 = vmatprep.subr.bf16.mxu0 0
  %49 = vmatpush1.bf16.msra.mxu0 0
  %50 = vmatprep.subr.bf16.mxu0 0
  %51 = vmatpush1.bf16.msra.mxu0 0
  %52 = vmatprep.subr.bf16.mxu0 0
  %53 = vmatpush1.bf16.msra.mxu0 0
  %54 = vmatprep.subr.bf16.mxu0 0
  %55 = vmatpush1.bf16.msra.mxu0 %v35
  %56 = vmatprep.subr.bf16.mxu0 0
  %57 = vmatpush1.bf16.msra.mxu0 %v34
  %58 = vmatprep.subr.bf16.mxu0 0
  %59 = vmatpush2.bf16.msra.mxu0 0
  %60 = vmatprep.subr.bf16.mxu0 0
  %61 = vmatpush2.bf16.msra.mxu0 0
  %62 = vmatprep.subr.bf16.mxu0 0
  %63 = vmatpush2.bf16.msra.mxu0 0
  %64 = vmatprep.subr.bf16.mxu0 0
  %65 = vmatpush2.bf16.msra.mxu0 0
  %66 = vmatprep.subr.bf16.mxu0 0
  %67 = vmatpush2.bf16.msra.mxu0 0
  %68 = vmatprep.subr.bf16.mxu0 0
  %69 = vmatpush2.bf16.msra.mxu0 0
  %70 = vmatprep.subr.bf16.mxu0 0
  %71 = vmatpush2.bf16.msra.mxu0 0
  %72 = vmatprep.subr.bf16.mxu0 0
  %73 = vmatpush2.bf16.msra.mxu0 0
  %74 = vmatprep.mubr.bf16.mxu0 0
  %75 = vmatmul.mubr.bf16.gmra.mxu0 %v40
  %v76 = vpop.f32.mrf.mxu0
  %v77 = vadd.f32 0.0, %v76
  %v78 = vpop.f32.mrf.mxu0
  %v79 = vpop.f32.mrf.mxu0
  %v80 = vpop.f32.mrf.mxu0
  %81 = vdwg.mxu0
  %v82 = vadd.f32 %v20, %v77
  %83 = vst [vmem:[#allocation2] sm:$0xff] %v82
  // Predicated region
  $region18: #{fast_rcnn_predictor.1} parent=0 // pred_check
    %p84 = pneg %p15
  $region19: #{fast_rcnn_predictor.1} parent=0 // pred_check_branch
    %86 = sbr.rel (%p84) target = $region21
  $region20: #{fast_rcnn_predictor.1} parent=0 // pred_region
    %v87 = vld [vmem:[#allocation2] sm:$0xff]
    %v88 = vld [vmem:[%s2] sm:$0x1]
    %v90 = vlaneseq
    %v91 = vshrl.u32 %v90, 7
    %v92 = vsub.s32 0, %v91
    %v93 = vrot.slane %v88, %v92
    %v95 = vadd.f32 %v87, %v93
    %96 = vst [vmem:[%s3] sm:$0xff] %v95
  $region21: #{fast_rcnn_predictor.1} parent=0 // pred_fallthru
    _
  // Predicated region
  $region22: #{fast_rcnn_predictor.1} parent=0 // pred_check
    _
  $region23: #{fast_rcnn_predictor.1} parent=0 // pred_check_branch
    %98 = sbr.rel (0) target = $region25
  $region24: #{fast_rcnn_predictor.1} parent=0 // pred_region
    _
  $region25: #{fast_rcnn_predictor.1} parent=0 // pred_fallthru
    _
  // Predicated region
  $region26: #{fast_rcnn_predictor.1} parent=0 // pred_check
    _
  $region27: #{fast_rcnn_predictor.1} parent=0 // pred_check_branch
    %100 = sbr.rel (0) target = $region29
  $region28: #{fast_rcnn_predictor.1} parent=0 // pred_region
    _
  $region29: #{fast_rcnn_predictor.1} parent=0 // pred_fallthru
    _

</llo_original>
